<compile_context>
chip_gen: v7x
topology: tpu7x:2x2x1
jax: 0.10.0
libtpu: 0.0.40
codegen_flags: <defaults>
</compile_context>

<pallas_src>
import functools

import jax
import jax.numpy as jnp
from jax.experimental import pallas as pl
from jax.experimental.pallas import tpu as pltpu


def _lossmv_partial_kernel(scores_ref, labels_ref, out_ref, *,
                           n_true, tile_n, lam1, lam2):
    """Per-tile partial sum of row losses: CE + lam1*mean-term + lam2*var-term."""
    i = pl.program_id(0)

    s = scores_ref[...].astype(jnp.float32)            # (TILE_N, C)
    lab = labels_ref[...]                               # (TILE_N, 1) int32

    # Row-validity mask: last tile may contain zero-padded rows.
    row = jax.lax.broadcasted_iota(jnp.int32, (tile_n, 1), 0)
    valid = ((i * tile_n + row) < n_true).astype(jnp.float32)     # (TILE_N, 1)

    # Lane iota reused for both the one-hot CE gather and the class grid.
    col = jax.lax.broadcasted_iota(jnp.int32, s.shape, 1)          # (TILE_N, C)
    grid_f = col.astype(jnp.float32)                               # 0..C-1

    # Numerically-stable softmax pieces (one exp per element, one log + one
    # reciprocal per row).
    m = jnp.max(s, axis=1, keepdims=True)               # (TILE_N, 1)
    e = jnp.exp(s - m)                                   # (TILE_N, C)
    z = jnp.sum(e, axis=1, keepdims=True)                # (TILE_N, 1)
    inv_z = 1.0 / z                                      # per-row reciprocal
    p = e * inv_z                                        # broadcast mul (VALU)
    lse = m + jnp.log(z)                                 # (TILE_N, 1)

    # Cross-entropy: lse - s[label], label gathered via lane-iota one-hot.
    picked = jnp.sum(jnp.where(col == lab, s, 0.0), axis=1, keepdims=True)
    ce = lse - picked                                    # (TILE_N, 1)

    # Mean-variance terms.
    labf = lab.astype(jnp.float32)
    mean = jnp.sum(grid_f * p, axis=1, keepdims=True)    # E_i, (TILE_N, 1)
    dmean = mean - labf
    mean_term = 0.5 * dmean * dmean                      # (TILE_N, 1)
    dev = grid_f - mean                                  # (TILE_N, C)
    var_term = jnp.sum(p * dev * dev, axis=1, keepdims=True)

    per_row = ce + lam1 * mean_term + lam2 * var_term    # (TILE_N, 1)
    out_ref[...] = jnp.sum(per_row * valid).reshape(1, 1, 1)


def loss_mv_forward(scores, labels, lam1=0.2, lam2=0.05):
    """LossMV.forward: CE + lam1 * mean-loss + lam2 * variance-loss."""
    assert scores.shape[1] > 1, 'Number of classes must be > 1 ....[NOT OK]'
    assert lam1 > 0.0 and lam2 > 0.0

    n, c = scores.shape
    labels2d = labels.astype(jnp.int32).reshape(n, 1)

    # Tile rows: multiple of 8, large enough to amortize ~0.35us/step grid
    # overhead, small enough that the lane-padded f32 working tile stays at or
    # under ~2 MiB so double-buffered inputs + elementwise temporaries remain
    # well inside the 32 MiB scoped VMEM limit on v5e/v6e/v7x.
    bytes_per_row = max(c, 128) * 4                      # f32 work, lane-padded
    tile_n = ((2 * 1024 * 1024) // bytes_per_row) // 8 * 8
    tile_n = max(8, min(1024, tile_n))
    tile_n = min(tile_n, ((n + 7) // 8) * 8)

    num_tiles = (n + tile_n - 1) // tile_n
    padded_n = num_tiles * tile_n
    if padded_n != n:
        # Zero-pad (finite values) so padded rows cannot produce NaN/Inf; they
        # are masked out inside the kernel and we divide by the true N below.
        scores = jnp.pad(scores, ((0, padded_n - n), (0, 0)))
        labels2d = jnp.pad(labels2d, ((0, padded_n - n), (0, 0)))

    kernel = functools.partial(
        _lossmv_partial_kernel,
        n_true=n, tile_n=tile_n, lam1=float(lam1), lam2=float(lam2))

    partials = pl.pallas_call(
        kernel,
        out_shape=jax.ShapeDtypeStruct((num_tiles, 1, 1), jnp.float32),
        grid=(num_tiles,),
        in_specs=[
            pl.BlockSpec((tile_n, c), lambda i: (i, 0)),
            pl.BlockSpec((tile_n, 1), lambda i: (i, 0)),
        ],
        out_specs=pl.BlockSpec((1, 1, 1), lambda i: (i, 0, 0)),
        compiler_params=pltpu.CompilerParams(
            dimension_semantics=("parallel",),
            vmem_limit_bytes=32 * 1024 * 1024,
        ),
        cost_estimate=pl.CostEstimate(
            flops=12 * n * c,
            transcendentals=n * c + 2 * n,      # exp/elem + log & recip per row
            bytes_accessed=n * c * scores.dtype.itemsize + n * 4 + num_tiles * 4,
        ),
    )(scores, labels2d)

    # Tiny final reduction (num_tiles scalars) done in plain JAX; divide by the
    # true N exactly once so partial last tiles do not bias the mean.
    return jnp.sum(partials) / jnp.float32(n)


def _reference_lossmv(scores, labels, lam1, lam2):
    """Pure-JAX reference matching the PyTorch LossMV.forward."""
    s = scores.astype(jnp.float32)
    logp = jax.nn.log_softmax(s, axis=1)
    picked = jnp.take_along_axis(logp, labels[:, None].astype(jnp.int32), axis=1)[:, 0]
    ce = -jnp.mean(picked)

    p = jax.nn.softmax(s, axis=1)
    _, c = s.shape
    grid = jnp.arange(c, dtype=jnp.float32)[None, :]
    mean = jnp.sum(grid * p, axis=1)
    mean_loss = 0.5 * jnp.mean((mean - labels.astype(jnp.float32)) ** 2)
    var_loss = jnp.mean(jnp.sum(p * (grid - mean[:, None]) ** 2, axis=1))
    return ce + lam1 * mean_loss + lam2 * var_loss


if __name__ == "__main__":
    key = jax.random.PRNGKey(0)
    k_scores, k_labels = jax.random.split(key)

    N, C = 8, 16  # small: batch=8, nbr_classes=16
    scores = jax.random.normal(k_scores, (N, C), dtype=jnp.float32)
    labels = jax.random.randint(k_labels, (N,), 0, C, dtype=jnp.int32)

    loss = jax.block_until_ready(loss_mv_forward(scores, labels))
    ref = jax.block_until_ready(_reference_lossmv(scores, labels, 0.2, 0.05))

    assert jnp.allclose(loss, ref, atol=1e-5, rtol=1e-5), (loss, ref)
    print("KERNEL_OK")
</pallas_src>

<mosaic_0001>
module attributes {stable_mosaic.version = 11 : i64} {
  func.func @_lossmv_partial_kernel(%arg0: i32, %arg1: memref<8x16xf32, #tpu.memory_space<vmem>>, %arg2: memref<8x1xi32, #tpu.memory_space<vmem>>, %arg3: memref<1x1x1xf32, #tpu.memory_space<vmem>>) attributes {dimension_semantics = [#tpu.dimension_semantics<parallel>], iteration_bounds = array<i64: 1>, scalar_prefetch = 0 : i64, scratch_operands = 0 : i64, tpu.core_type = #tpu.core_type<tc>, window_params = [{transform_indices = @transform_0, window_bounds = array<i64: 8, 16>}, {transform_indices = @transform_1, window_bounds = array<i64: 8, 1>}, {transform_indices = @transform_2, window_bounds = array<i64: 1, 1, 1>}]} {
    %c0 = arith.constant 0 : index
    %c0_0 = arith.constant 0 : index
    %0 = vector.load %arg1[%c0, %c0_0] : memref<8x16xf32, #tpu.memory_space<vmem>>, vector<8x16xf32>
    %c0_1 = arith.constant 0 : index
    %c0_2 = arith.constant 0 : index
    %1 = vector.load %arg2[%c0_1, %c0_2] : memref<8x1xi32, #tpu.memory_space<vmem>>, vector<8x1xi32>
    %2 = tpu.iota {dimensions = array<i32: 0>} : vector<8x1xi32>
    %c8_i32 = arith.constant 8 : i32
    %3 = arith.muli %arg0, %c8_i32 : i32
    %4 = vector.broadcast %3 : i32 to vector<8x1xi32>
    %5 = arith.addi %4, %2 : vector<8x1xi32>
    %c8_i32_3 = arith.constant 8 : i32
    %6 = vector.broadcast %c8_i32_3 : i32 to vector<8x1xi32>
    %7 = arith.cmpi slt, %5, %6 : vector<8x1xi32>
    %8 = arith.extui %7 : vector<8x1xi1> to vector<8x1xi32>
    %9 = arith.sitofp %8 : vector<8x1xi32> to vector<8x1xf32>
    %10 = tpu.iota {dimensions = array<i32: 1>} : vector<8x16xi32>
    %11 = arith.sitofp %10 : vector<8x16xi32> to vector<8x16xf32>
    %cst = arith.constant dense<0xFF800000> : vector<8xf32>
    %12 = vector.multi_reduction <maximumf>, %0, %cst [1] : vector<8x16xf32> to vector<8xf32>
    %13 = vector.shape_cast %12 : vector<8xf32> to vector<8x1xf32>
    %14 = vector.broadcast %13 : vector<8x1xf32> to vector<8x16xf32>
    %15 = arith.subf %0, %14 : vector<8x16xf32>
    %16 = math.exp %15 : vector<8x16xf32>
    %cst_4 = arith.constant dense<0.000000e+00> : vector<8xf32>
    %17 = vector.multi_reduction <add>, %16, %cst_4 [1] : vector<8x16xf32> to vector<8xf32>
    %18 = vector.shape_cast %17 : vector<8xf32> to vector<8x1xf32>
    %cst_5 = arith.constant 1.000000e+00 : f32
    %19 = vector.broadcast %cst_5 : f32 to vector<8x1xf32>
    %20 = arith.divf %19, %18 : vector<8x1xf32>
    %21 = vector.broadcast %20 : vector<8x1xf32> to vector<8x16xf32>
    %22 = arith.mulf %16, %21 : vector<8x16xf32>
    %23 = math.log %18 : vector<8x1xf32>
    %24 = arith.addf %13, %23 : vector<8x1xf32>
    %25 = vector.broadcast %1 : vector<8x1xi32> to vector<8x16xi32>
    %26 = arith.cmpi eq, %10, %25 : vector<8x16xi32>
    %cst_6 = arith.constant 0.000000e+00 : f32
    %27 = vector.broadcast %cst_6 : f32 to vector<8x16xf32>
    %28 = arith.select %26, %0, %27 : vector<8x16xi1>, vector<8x16xf32>
    %cst_7 = arith.constant dense<0.000000e+00> : vector<8xf32>
    %29 = vector.multi_reduction <add>, %28, %cst_7 [1] : vector<8x16xf32> to vector<8xf32>
    %30 = vector.shape_cast %29 : vector<8xf32> to vector<8x1xf32>
    %31 = arith.subf %24, %30 : vector<8x1xf32>
    %32 = arith.sitofp %1 : vector<8x1xi32> to vector<8x1xf32>
    %33 = arith.mulf %11, %22 : vector<8x16xf32>
    %cst_8 = arith.constant dense<0.000000e+00> : vector<8xf32>
    %34 = vector.multi_reduction <add>, %33, %cst_8 [1] : vector<8x16xf32> to vector<8xf32>
    %35 = vector.shape_cast %34 : vector<8xf32> to vector<8x1xf32>
    %36 = arith.subf %35, %32 : vector<8x1xf32>
    %cst_9 = arith.constant 5.000000e-01 : f32
    %37 = vector.broadcast %cst_9 : f32 to vector<8x1xf32>
    %38 = arith.mulf %37, %36 : vector<8x1xf32>
    %39 = arith.mulf %38, %36 : vector<8x1xf32>
    %40 = vector.broadcast %35 : vector<8x1xf32> to vector<8x16xf32>
    %41 = arith.subf %11, %40 : vector<8x16xf32>
    %42 = arith.mulf %22, %41 : vector<8x16xf32>
    %43 = arith.mulf %42, %41 : vector<8x16xf32>
    %cst_10 = arith.constant dense<0.000000e+00> : vector<8xf32>
    %44 = vector.multi_reduction <add>, %43, %cst_10 [1] : vector<8x16xf32> to vector<8xf32>
    %45 = vector.shape_cast %44 : vector<8xf32> to vector<8x1xf32>
    %cst_11 = arith.constant 2.000000e-01 : f32
    %46 = vector.broadcast %cst_11 : f32 to vector<8x1xf32>
    %47 = arith.mulf %46, %39 : vector<8x1xf32>
    %48 = arith.addf %31, %47 : vector<8x1xf32>
    %cst_12 = arith.constant 5.000000e-02 : f32
    %49 = vector.broadcast %cst_12 : f32 to vector<8x1xf32>
    %50 = arith.mulf %49, %45 : vector<8x1xf32>
    %51 = arith.addf %48, %50 : vector<8x1xf32>
    %52 = arith.mulf %51, %9 : vector<8x1xf32>
    %53 = vector.shape_cast %52 : vector<8x1xf32> to vector<1x8x1xf32>
    %cst_13 = arith.constant dense<0.000000e+00> : vector<1xf32>
    %54 = vector.multi_reduction <add>, %53, %cst_13 [1, 2] : vector<1x8x1xf32> to vector<1xf32>
    %55 = vector.shape_cast %54 : vector<1xf32> to vector<1x1x1xf32>
    %56 = vector.extract %55[0, 0, 0] : f32 from vector<1x1x1xf32>
    %57 = vector.broadcast %56 : f32 to vector<1x1x1xf32>
    %c0_14 = arith.constant 0 : index
    %c0_15 = arith.constant 0 : index
    %c0_16 = arith.constant 0 : index
    %58 = vector.load %arg3[%c0_14, %c0_15, %c0_16] : memref<1x1x1xf32, #tpu.memory_space<vmem>>, vector<1x1x1xf32>
    tpu.vector_store %arg3[%c0_14, %c0_15, %c0_16], %57 {strides = array<i32>} : memref<1x1x1xf32, #tpu.memory_space<vmem>>, vector<1x1x1xf32>,
    return
  }
  func.func @transform_0(%arg0: i32) -> (i32, i32) {
    %c0_i32 = arith.constant 0 : i32
    %c0_i32_0 = arith.constant 0 : i32
    return %arg0, %c0_i32 : i32, i32
  }
  func.func @transform_1(%arg0: i32) -> (i32, i32) {
    %c0_i32 = arith.constant 0 : i32
    %c0_i32_0 = arith.constant 0 : i32
    return %arg0, %c0_i32 : i32, i32
  }
  func.func @transform_2(%arg0: i32) -> (i32, i32, i32) {
    %c0_i32 = arith.constant 0 : i32
    %c0_i32_0 = arith.constant 0 : i32
    %c0_i32_1 = arith.constant 0 : i32
    return %arg0, %c0_i32, %c0_i32_0 : i32, i32, i32
  }
}

</mosaic_0001>

<llo_original>
// kernel: tpu_custom_call.1
$region0: #{tpu_custom_call.1}
  #allocation0 [shape = 'u32[]', space=smem, size = 0x4, offset = 0x4, fixed_abs, tag = 'smem constant byte address 0x4 - core index']
  #allocation1 [shape = 'u32[144,128]{1,0:T(1,128)}', space=vmem, size = 0x12000, scoped, tag = 'internal scratch']
  %s0 = inlined_call_operand.vmem [shape: f32[8,16], index: 0, kind: input, shape index: {}]
  %s1 = inlined_call_operand.vmem [shape: s32[8,1], index: 1, kind: input, shape index: {}]
  %s2 = inlined_call_operand.hbm [shape: f32[1,1,1], index: 2, kind: output, shape index: {}]
  %s3 = sld [smem:[#allocation0]]
  $region18: #{tpu_custom_call.1} parent=0
    _
  %s5 = ssub.s32 1, %s3
  %s6 = scalar_select 0, %s5, %s3
  $region1: #{tpu_custom_call.1} parent=0
    #allocation2 [shape = 'u8[512]{0}', space=vmem, size = 0x400, scoped, tag = 'output window, operand 0, single buffered']
    #allocation3 [shape = 's32[1]{0}', space=sflag, size = 0x4, scoped, tag = 'scoped memory for tpu_custom_call.1']
    %7 = vsyncpa [#allocation3], 0
    // Predicated region
    $region2: #{tpu_custom_call.1} parent=1 // pred_check
      _
    $region3: #{tpu_custom_call.1} parent=1 // pred_check_branch
      %9 = sbr.rel (0) target = $region5
    $region4: #{tpu_custom_call.1} parent=1 // pred_region
      _
    $region5: #{tpu_custom_call.1} parent=1 // pred_fallthru
      _
    // Predicated region
    $region6: #{tpu_custom_call.1} parent=1 // pred_check
      _
    $region7: #{tpu_custom_call.1} parent=1 // pred_check_branch
      %11 = sbr.rel (0) target = $region9
    $region8: #{tpu_custom_call.1} parent=1 // pred_region
      _
    $region9: #{tpu_custom_call.1} parent=1 // pred_fallthru
      _
    %v12 = vld [vmem:[%s0] sm:$0xff]
    %v13 = vld [vmem:[%s1] sm:$0xff]
    %v14 = vlaneseq
    %v15 = vshrl.u32 %v14, 7
    %s16 = smul.u32 0, 8
    %v17 = vstv %s16
    %v18 = vadd.s32 %v17, %v15
    %vm19 = vcmp.lt.s32.totalorder %v18, 8
    %v20 = vsel %vm19, 1, 0
    %v21 = vcvt.s32.f32 %v20
    %v22 = vlaneseq
    %v23 = vand.u32 %v22, 127
    %v24 = vcvt.s32.f32 %v23
    %vm25 = vcmask 130048
    %v26 = vsel %vm25, %v12, -inf
    %27 = vmax.xlane.f32.xlu0 %v26
    %v28 = vpop.xlane.xlu0 %27
    %v29 = vsub.f32 %v12, %v28
    %v30 = vmul.f32 %v29, 1.442695
    %v31 = vpow.pop %v30
    %v32 = vsel %vm25, %v31, 0.0
    %33 = vadd.xlane.f32.xlu0 %v32
    %v34 = vpop.xlane.xlu0 %33
    %v35 = vrcp.pop %v34
    %v36 = vmul.f32 1.0, %v35
    %v37 = vmul.f32 %v31, %v36
    %v38 = vlog2.pop %v34
    %v39 = vmul.f32 %v38, 0.6931472
    %v40 = vadd.f32 %v28, %v39
    %41 = vset.pattern.permute.xlu0 0
    %42 = vperm.xlu0 %41, %v13
    %v43 = vpop.permute.xlu0 %42
    %vm44 = vcmp.eq.s32.totalorder %v23, %v43
    %v45 = vsel %vm44, %v12, 0.0
    %v46 = vsel %vm25, %v45, 0.0
    %47 = vadd.xlane.f32.xlu0 %v46
    %v48 = vpop.xlane.xlu0 %47
    %v49 = vsub.f32 %v40, %v48
    %v50 = vcvt.s32.f32 %v13
    %v51 = vmul.f32 %v24, %v37
    %v52 = vsel %vm25, %v51, 0.0
    %53 = vadd.xlane.f32.xlu0 %v52
    %v54 = vpop.xlane.xlu0 %53
    %v55 = vsub.f32 %v54, %v50
    %v56 = vmul.f32 %v55, 0.5
    %v57 = vmul.f32 %v56, %v55
    %v58 = vsub.f32 %v24, %v54
    %v59 = vmul.f32 %v37, %v58
    %v60 = vmul.f32 %v59, %v58
    %v61 = vsel %vm25, %v60, 0.0
    %62 = vadd.xlane.f32.xlu0 %v61
    %v63 = vpop.xlane.xlu0 %62
    %v64 = vmul.f32 %v57, 0.2
    %v65 = vadd.f32 %v49, %v64
    %v66 = vmul.f32 %v63, 0.05
    %v67 = vadd.f32 %v65, %v66
    %v68 = vmul.f32 %v67, %v21
    %vm69 = vcmask 7168
    %v70 = vsel %vm69, %v68, 0.0
    %71 = vadd.xlane.f32.xlu0 %v70
    %v72 = vpop.xlane.xlu0 %71
    %v73 = vrot.slane %v72, 4
    %v74 = vadd.f32 %v72, %v73
    %v75 = vrot.slane %v74, 2
    %v76 = vadd.f32 %v74, %v75
    %v77 = vrot.slane %v76, 1
    %v78 = vadd.f32 %v76, %v77
    %s79 = vtos %v78
    %v80 = vstv %s79
    %vm81 = vcmask 0
    %82 = vst.msk [vmem:[#allocation2] sm:$0x1] %vm81, %v80
    // Predicated region
    $region10: #{tpu_custom_call.1} parent=1 // pred_check
      _
    $region11: #{tpu_custom_call.1} parent=1 // pred_check_branch
      %84 = sbr.rel (0) target = $region13
    $region12: #{tpu_custom_call.1} parent=1 // pred_region
      %s86 = ssub.s32 16, 16
      %87 = vsyncadd [#allocation3], %s86
      %s89 = sshll.u32 [#allocation2], 4
      %s90 = int_to_ptr.vmem [resolvable:$true] %s89
      %92 = dma.vmem_to_hbm [thread:$0]  %s90, 16, %s2, [#allocation3]
    $region13: #{tpu_custom_call.1} parent=1 // pred_fallthru
      _
    // Predicated region
    $region14: #{tpu_custom_call.1} parent=1 // pred_check
      _
    $region15: #{tpu_custom_call.1} parent=1 // pred_check_branch
      %94 = sbr.rel (0) target = $region17
    $region16: #{tpu_custom_call.1} parent=1 // pred_region
      %95 = dma.done [#allocation3], 16
    $region17: #{tpu_custom_call.1} parent=1 // pred_fallthru
      _
    %96 = vsyncpa [#allocation3], 1

</llo_original>
